<compile_context>
chip_gen: v7x
topology: tpu7x:2x2x1
jax: 0.10.0
libtpu: 0.0.40
codegen_flags: <defaults>
</compile_context>

<pallas_src>
import jax
import jax.numpy as jnp
from jax.experimental import pallas as pl
from jax.experimental.pallas import tpu as pltpu

IN_FEATURES = 28 * 28   # 784
OUT_FEATURES = 10


def _linear_kernel(x_ref, wt_ref, o_ref):
    # x_ref : (TM, 784) f32 in VMEM (streamed over the batch)
    # wt_ref: (784, 10) f32 in VMEM (resident across grid steps)
    # o_ref : (TM, 10)  f32 in VMEM
    o_ref[...] = jnp.dot(x_ref[...], wt_ref[...],
                         preferred_element_type=jnp.float32)


def _round_up(n, m):
    return ((n + m - 1) // m) * m


def mlp_forward(x_nchw, weight, *, tm=2048):
    """y = x.view(-1, 784) @ weight.T   (bias-free QuantizedLinear, quantMethod=None).

    x_nchw : (B, 1, 28, 28) float32
    weight : (10, 784) float32          (PyTorch nn.Linear convention: out x in)
    returns: (B, 10) float32
    """
    B = x_nchw.shape[0]
    x = x_nchw.reshape(B, IN_FEATURES)   # metadata-only view change
    wt = weight.T                        # (784, 10), ~31 KiB, done once

    # Batch tile: multiple of 8, <= min(tm, 4096), and small enough that the
    # grid has >= 2 steps whenever the batch allows it (v7x megacore split).
    tm_cap = min(tm, 4096)
    half = max(256, _round_up(pl.cdiv(B, 2), 8))
    TM = min(tm_cap, half, _round_up(B, 8))
    TM = max(TM, 8)
    grid = (pl.cdiv(B, TM),)

    return pl.pallas_call(
        _linear_kernel,
        out_shape=jax.ShapeDtypeStruct((B, OUT_FEATURES), jnp.float32),
        grid=grid,
        in_specs=[
            pl.BlockSpec((TM, IN_FEATURES), lambda i: (i, 0)),            # stream x over B
            pl.BlockSpec((IN_FEATURES, OUT_FEATURES), lambda i: (0, 0)),  # W^T resident
        ],
        out_specs=pl.BlockSpec((TM, OUT_FEATURES), lambda i: (i, 0)),
        compiler_params=pltpu.CompilerParams(
            dimension_semantics=("parallel",),
            vmem_limit_bytes=48 * 1024 * 1024,
        ),
    )(x, wt)


if __name__ == "__main__":
    key = jax.random.PRNGKey(0)
    k_x, k_w = jax.random.split(key)

    # Deliberately NOT a multiple of 8: exercises Pallas tail-block masking
    # (no explicit pad / output slice anymore).
    B = 12
    x = jax.random.normal(k_x, (B, 1, 28, 28), dtype=jnp.float32)

    # fc3 weight: nn.Linear(784, 10, bias=False) -> (10, 784),
    # PyTorch-default-like uniform bound 1/sqrt(in_features).
    bound = 1.0 / (28.0 * 28.0) ** 0.5
    w = jax.random.uniform(k_w, (OUT_FEATURES, IN_FEATURES), dtype=jnp.float32,
                           minval=-bound, maxval=bound)

    fwd = jax.jit(mlp_forward)
    y = jax.block_until_ready(fwd(x, w))

    # Pure-JAX f32 reference.  Tolerance covers MXU default-precision matmul.
    y_ref = x.reshape(B, IN_FEATURES) @ w.T
    assert y.shape == (B, OUT_FEATURES)
    assert jnp.allclose(y, y_ref, atol=2e-2, rtol=2e-2), (
        float(jnp.max(jnp.abs(y - y_ref))))

    print("KERNEL_OK")
</pallas_src>

<mosaic_0001>
module attributes {stable_mosaic.version = 11 : i64} {
  func.func @_linear_kernel(%arg0: i32, %arg1: memref<16x784xf32, #tpu.memory_space<vmem>>, %arg2: memref<784x10xf32, #tpu.memory_space<vmem>>, %arg3: memref<16x10xf32, #tpu.memory_space<vmem>>) attributes {dimension_semantics = [#tpu.dimension_semantics<parallel>], iteration_bounds = array<i64: 1>, scalar_prefetch = 0 : i64, scratch_operands = 0 : i64, tpu.core_type = #tpu.core_type<tc>, window_params = [{transform_indices = @transform_0, window_bounds = array<i64: 16, 784>}, {pipeline_mode = #tpu.pipeline_mode<synchronous>, transform_indices = @transform_1, window_bounds = array<i64: 784, 10>}, {transform_indices = @transform_2, window_bounds = array<i64: 16, 10>}]} {
    %c0 = arith.constant 0 : index
    %c0_0 = arith.constant 0 : index
    %0 = vector.load %arg1[%c0, %c0_0] : memref<16x784xf32, #tpu.memory_space<vmem>>, vector<16x784xf32>
    %c0_1 = arith.constant 0 : index
    %c0_2 = arith.constant 0 : index
    %1 = vector.load %arg2[%c0_1, %c0_2] : memref<784x10xf32, #tpu.memory_space<vmem>>, vector<784x10xf32>
    %cst = arith.constant dense<0.000000e+00> : vector<16x10xf32>
    %2 = tpu.matmul %0, %1, %cst {dimension_numbers = #tpu.dot_dimension_numbers<[1], [0], [0], [1], [0, 0, 1, 1], [], []>} : vector<16x784xf32>, vector<784x10xf32>, vector<16x10xf32> -> vector<16x10xf32>
    %c0_3 = arith.constant 0 : index
    %c0_4 = arith.constant 0 : index
    %3 = vector.load %arg3[%c0_3, %c0_4] : memref<16x10xf32, #tpu.memory_space<vmem>>, vector<16x10xf32>
    tpu.vector_store %arg3[%c0_3, %c0_4], %2 {strides = array<i32>} : memref<16x10xf32, #tpu.memory_space<vmem>>, vector<16x10xf32>,
    return
  }
  func.func @transform_0(%arg0: i32) -> (i32, i32) {
    %c0_i32 = arith.constant 0 : i32
    %c0_i32_0 = arith.constant 0 : i32
    return %arg0, %c0_i32 : i32, i32
  }
  func.func @transform_1(%arg0: i32) -> (i32, i32) {
    %c0_i32 = arith.constant 0 : i32
    %c0_i32_0 = arith.constant 0 : i32
    %c0_i32_1 = arith.constant 0 : i32
    return %c0_i32, %c0_i32_0 : i32, i32
  }
  func.func @transform_2(%arg0: i32) -> (i32, i32) {
    %c0_i32 = arith.constant 0 : i32
    %c0_i32_0 = arith.constant 0 : i32
    return %arg0, %c0_i32 : i32, i32
  }
}

</mosaic_0001>

<llo_original>
// kernel: mlp_forward.1
$region0: #{mlp_forward.1}
  #allocation0 [shape = 'u32[]', space=smem, size = 0x4, offset = 0x4, fixed_abs, tag = 'smem constant byte address 0x4 - core index']
  #allocation1 [shape = 'u32[144,128]{1,0:T(1,128)}', space=vmem, size = 0x12000, scoped, tag = 'internal scratch']
  %s0 = inlined_call_operand.vmem [shape: f32[12,784], index: 0, kind: input, shape index: {}]
  %s1 = inlined_call_operand.vmem [shape: f32[784,10], index: 1, kind: input, shape index: {}]
  %s2 = inlined_call_operand.hbm [shape: f32[12,10], index: 2, kind: output, shape index: {}]
  %s3 = sld [smem:[#allocation0]]
  $region18: #{mlp_forward.1} parent=0
    _
  %s5 = ssub.s32 1, %s3
  %s6 = scalar_select 0, %s5, %s3
  $region1: #{mlp_forward.1} parent=0
    #allocation2 [shape = 'u8[8192]{0}', space=vmem, size = 0x2000, scoped, tag = 'output window, operand 0, single buffered']
    #allocation3 [shape = 's32[1]{0}', space=sflag, size = 0x4, scoped, tag = 'scoped memory for mlp_forward.1']
    %7 = vsyncpa [#allocation3], 0
    // Predicated region
    $region2: #{mlp_forward.1} parent=1 // pred_check
      _
    $region3: #{mlp_forward.1} parent=1 // pred_check_branch
      %9 = sbr.rel (0) target = $region5
    $region4: #{mlp_forward.1} parent=1 // pred_region
      _
    $region5: #{mlp_forward.1} parent=1 // pred_fallthru
      _
    // Predicated region
    $region6: #{mlp_forward.1} parent=1 // pred_check
      _
    $region7: #{mlp_forward.1} parent=1 // pred_check_branch
      %11 = sbr.rel (0) target = $region9
    $region8: #{mlp_forward.1} parent=1 // pred_region
      _
    $region9: #{mlp_forward.1} parent=1 // pred_fallthru
      _
    %v12 = vld [vmem:[%s0] sm:$0xff]
    %v13 = vld [vmem:[%s0 + $0x8] sm:$0xff]
    %v14 = vld [vmem:[%s0 + $0x10] sm:$0xff]
    %v15 = vld [vmem:[%s0 + $0x18] sm:$0xff]
    %v16 = vld [vmem:[%s0 + $0x20] sm:$0xff]
    %v17 = vld [vmem:[%s0 + $0x28] sm:$0xff]
    %v18 = vld [vmem:[%s0 + $0x30] sm:$0xff]
    %v19 = vld [vmem:[%s0 + $0x38] sm:$0xff]
    %v20 = vld [vmem:[%s0 + $0x40] sm:$0xff]
    %v21 = vld [vmem:[%s0 + $0x48] sm:$0xff]
    %v22 = vld [vmem:[%s0 + $0x50] sm:$0xff]
    %v23 = vld [vmem:[%s0 + $0x58] sm:$0xff]
    %v24 = vld [vmem:[%s0 + $0x60] sm:$0xff]
    %v25 = vld [vmem:[%s0 + $0x68] sm:$0xff]
    %v26 = vld [vmem:[%s1] sm:$0xff]
    %v27 = vld [vmem:[%s1 + $0x8] sm:$0xff]
    %v28 = vld [vmem:[%s1 + $0x10] sm:$0xff]
    %v29 = vld [vmem:[%s1 + $0x18] sm:$0xff]
    %v30 = vld [vmem:[%s1 + $0x20] sm:$0xff]
    %v31 = vld [vmem:[%s1 + $0x28] sm:$0xff]
    %v32 = vld [vmem:[%s1 + $0x30] sm:$0xff]
    %v33 = vld [vmem:[%s1 + $0x38] sm:$0xff]
    %v34 = vld [vmem:[%s1 + $0x40] sm:$0xff]
    %v35 = vld [vmem:[%s1 + $0x48] sm:$0xff]
    %v36 = vld [vmem:[%s1 + $0x50] sm:$0xff]
    %v37 = vld [vmem:[%s1 + $0x58] sm:$0xff]
    %v38 = vld [vmem:[%s1 + $0x60] sm:$0xff]
    %v39 = vld [vmem:[%s1 + $0x68] sm:$0xff]
    %v40 = vld [vmem:[%s1 + $0x70] sm:$0xff]
    %v41 = vld [vmem:[%s1 + $0x78] sm:$0xff]
    %v42 = vld [vmem:[%s1 + $0x80] sm:$0xff]
    %v43 = vld [vmem:[%s1 + $0x88] sm:$0xff]
    %v44 = vld [vmem:[%s1 + $0x90] sm:$0xff]
    %v45 = vld [vmem:[%s1 + $0x98] sm:$0xff]
    %v46 = vld [vmem:[%s1 + $0xa0] sm:$0xff]
    %v47 = vld [vmem:[%s1 + $0xa8] sm:$0xff]
    %v48 = vld [vmem:[%s1 + $0xb0] sm:$0xff]
    %v49 = vld [vmem:[%s1 + $0xb8] sm:$0xff]
    %v50 = vld [vmem:[%s1 + $0xc0] sm:$0xff]
    %v51 = vld [vmem:[%s1 + $0xc8] sm:$0xff]
    %v52 = vld [vmem:[%s1 + $0xd0] sm:$0xff]
    %v53 = vld [vmem:[%s1 + $0xd8] sm:$0xff]
    %v54 = vld [vmem:[%s1 + $0xe0] sm:$0xff]
    %v55 = vld [vmem:[%s1 + $0xe8] sm:$0xff]
    %v56 = vld [vmem:[%s1 + $0xf0] sm:$0xff]
    %v57 = vld [vmem:[%s1 + $0xf8] sm:$0xff]
    %v58 = vld [vmem:[%s1 + $0x100] sm:$0xff]
    %v59 = vld [vmem:[%s1 + $0x108] sm:$0xff]
    %v60 = vld [vmem:[%s1 + $0x110] sm:$0xff]
    %v61 = vld [vmem:[%s1 + $0x118] sm:$0xff]
    %v62 = vld [vmem:[%s1 + $0x120] sm:$0xff]
    %v63 = vld [vmem:[%s1 + $0x128] sm:$0xff]
    %v64 = vld [vmem:[%s1 + $0x130] sm:$0xff]
    %v65 = vld [vmem:[%s1 + $0x138] sm:$0xff]
    %v66 = vld [vmem:[%s1 + $0x140] sm:$0xff]
    %v67 = vld [vmem:[%s1 + $0x148] sm:$0xff]
    %v68 = vld [vmem:[%s1 + $0x150] sm:$0xff]
    %v69 = vld [vmem:[%s1 + $0x158] sm:$0xff]
    %v70 = vld [vmem:[%s1 + $0x160] sm:$0xff]
    %v71 = vld [vmem:[%s1 + $0x168] sm:$0xff]
    %v72 = vld [vmem:[%s1 + $0x170] sm:$0xff]
    %v73 = vld [vmem:[%s1 + $0x178] sm:$0xff]
    %v74 = vld [vmem:[%s1 + $0x180] sm:$0xff]
    %v75 = vld [vmem:[%s1 + $0x188] sm:$0xff]
    %v76 = vld [vmem:[%s1 + $0x190] sm:$0xff]
    %v77 = vld [vmem:[%s1 + $0x198] sm:$0xff]
    %v78 = vld [vmem:[%s1 + $0x1a0] sm:$0xff]
    %v79 = vld [vmem:[%s1 + $0x1a8] sm:$0xff]
    %v80 = vld [vmem:[%s1 + $0x1b0] sm:$0xff]
    %v81 = vld [vmem:[%s1 + $0x1b8] sm:$0xff]
    %v82 = vld [vmem:[%s1 + $0x1c0] sm:$0xff]
    %v83 = vld [vmem:[%s1 + $0x1c8] sm:$0xff]
    %v84 = vld [vmem:[%s1 + $0x1d0] sm:$0xff]
    %v85 = vld [vmem:[%s1 + $0x1d8] sm:$0xff]
    %v86 = vld [vmem:[%s1 + $0x1e0] sm:$0xff]
    %v87 = vld [vmem:[%s1 + $0x1e8] sm:$0xff]
    %v88 = vld [vmem:[%s1 + $0x1f0] sm:$0xff]
    %v89 = vld [vmem:[%s1 + $0x1f8] sm:$0xff]
    %v90 = vld [vmem:[%s1 + $0x200] sm:$0xff]
    %v91 = vld [vmem:[%s1 + $0x208] sm:$0xff]
    %v92 = vld [vmem:[%s1 + $0x210] sm:$0xff]
    %v93 = vld [vmem:[%s1 + $0x218] sm:$0xff]
    %v94 = vld [vmem:[%s1 + $0x220] sm:$0xff]
    %v95 = vld [vmem:[%s1 + $0x228] sm:$0xff]
    %v96 = vld [vmem:[%s1 + $0x230] sm:$0xff]
    %v97 = vld [vmem:[%s1 + $0x238] sm:$0xff]
    %v98 = vld [vmem:[%s1 + $0x240] sm:$0xff]
    %v99 = vld [vmem:[%s1 + $0x248] sm:$0xff]
    %v100 = vld [vmem:[%s1 + $0x250] sm:$0xff]
    %v101 = vld [vmem:[%s1 + $0x258] sm:$0xff]
    %v102 = vld [vmem:[%s1 + $0x260] sm:$0xff]
    %v103 = vld [vmem:[%s1 + $0x268] sm:$0xff]
    %v104 = vld [vmem:[%s1 + $0x270] sm:$0xff]
    %v105 = vld [vmem:[%s1 + $0x278] sm:$0xff]
    %v106 = vld [vmem:[%s1 + $0x280] sm:$0xff]
    %v107 = vld [vmem:[%s1 + $0x288] sm:$0xff]
    %v108 = vld [vmem:[%s1 + $0x290] sm:$0xff]
    %v109 = vld [vmem:[%s1 + $0x298] sm:$0xff]
    %v110 = vld [vmem:[%s1 + $0x2a0] sm:$0xff]
    %v111 = vld [vmem:[%s1 + $0x2a8] sm:$0xff]
    %v112 = vld [vmem:[%s1 + $0x2b0] sm:$0xff]
    %v113 = vld [vmem:[%s1 + $0x2b8] sm:$0xff]
    %v114 = vld [vmem:[%s1 + $0x2c0] sm:$0xff]
    %v115 = vld [vmem:[%s1 + $0x2c8] sm:$0xff]
    %v116 = vld [vmem:[%s1 + $0x2d0] sm:$0xff]
    %v117 = vld [vmem:[%s1 + $0x2d8] sm:$0xff]
    %v118 = vld [vmem:[%s1 + $0x2e0] sm:$0xff]
    %v119 = vld [vmem:[%s1 + $0x2e8] sm:$0xff]
    %v120 = vld [vmem:[%s1 + $0x2f0] sm:$0xff]
    %v121 = vld [vmem:[%s1 + $0x2f8] sm:$0xff]
    %v122 = vld [vmem:[%s1 + $0x300] sm:$0xff]
    %v123 = vld [vmem:[%s1 + $0x308] sm:$0xff]
    %vm124 = vcmask 130048
    %v126 = vsel %vm124, %v18, 0
    %v129 = vsel %vm124, %v25, 0
    %131 = vmatprep.subr.mxu0 0.0
    %132 = vmatpush1.msra.mxu0 %v26
    %133 = vmatprep.subr.mxu0 0.0
    %134 = vmatpush1.msra.mxu0 %v27
    %135 = vmatprep.subr.mxu0 0.0
    %136 = vmatpush1.msra.mxu0 %v28
    %137 = vmatprep.subr.mxu0 0.0
    %138 = vmatpush1.msra.mxu0 %v29
    %139 = vmatprep.subr.mxu0 0.0
    %140 = vmatpush1.msra.mxu0 %v30
    %141 = vmatprep.subr.mxu0 0.0
    %142 = vmatpush1.msra.mxu0 %v31
    %143 = vmatprep.subr.mxu0 0.0
    %144 = vmatpush1.msra.mxu0 %v32
    %145 = vmatprep.subr.mxu0 0.0
    %146 = vmatpush1.msra.mxu0 %v33
    %147 = vmatprep.subr.mxu0 0.0
    %148 = vmatpush1.msra.mxu0 %v34
    %149 = vmatprep.subr.mxu0 0.0
    %150 = vmatpush1.msra.mxu0 %v35
    %151 = vmatprep.subr.mxu0 0.0
    %152 = vmatpush1.msra.mxu0 %v36
    %153 = vmatprep.subr.mxu0 0.0
    %154 = vmatpush1.msra.mxu0 %v37
    %155 = vmatprep.subr.mxu0 0.0
    %156 = vmatpush1.msra.mxu0 %v38
    %157 = vmatprep.subr.mxu0 0.0
    %158 = vmatpush1.msra.mxu0 %v39
    %159 = vmatprep.subr.mxu0 0.0
    %160 = vmatpush1.msra.mxu0 %v40
    %161 = vmatprep.subr.mxu0 0.0
    %162 = vmatpush1.msra.mxu0 %v41
    %163 = vmatprep.subr.mxu0 0.0
    %164 = vmatpush1.msra.mxu0 %v42
    %165 = vmatprep.subr.mxu0 0.0
    %166 = vmatpush1.msra.mxu0 %v43
    %167 = vmatprep.subr.mxu0 0.0
    %168 = vmatpush1.msra.mxu0 %v44
    %169 = vmatprep.subr.mxu0 0.0
    %170 = vmatpush1.msra.mxu0 %v45
    %171 = vmatprep.subr.mxu0 0.0
    %172 = vmatpush1.msra.mxu0 %v46
    %173 = vmatprep.subr.mxu0 0.0
    %174 = vmatpush1.msra.mxu0 %v47
    %175 = vmatprep.subr.mxu0 0.0
    %176 = vmatpush1.msra.mxu0 %v48
    %177 = vmatprep.subr.mxu0 0.0
    %178 = vmatpush1.msra.mxu0 %v49
    %179 = vmatprep.subr.mxu0 0.0
    %180 = vmatpush1.msra.mxu0 %v50
    %181 = vmatprep.subr.mxu0 0.0
    %182 = vmatpush1.msra.mxu0 %v51
    %183 = vmatprep.subr.mxu0 0.0
    %184 = vmatpush1.msra.mxu0 %v52
    %185 = vmatprep.subr.mxu0 0.0
    %186 = vmatpush1.msra.mxu0 %v53
    %187 = vmatprep.subr.mxu0 0.0
    %188 = vmatpush1.msra.mxu0 %v54
    %189 = vmatprep.subr.mxu0 0.0
    %190 = vmatpush1.msra.mxu0 %v55
    %191 = vmatprep.subr.mxu0 0.0
    %192 = vmatpush1.msra.mxu0 %v56
    %193 = vmatprep.subr.mxu0 0.0
    %194 = vmatpush1.msra.mxu0 %v57
    %195 = vmatprep.mubr.f32.mxu0 %v13
    %196 = vmatmul.mubr.f32.gmra.mrb[0].mxu0 %v12
    %v197 = vpop.f32.mrb[0].mxu0
    %v198 = vadd.f32 0.0, %v197
    %v199 = vpop.f32.mrb[0].mxu0
    %200 = vmatprep.mubr.f32.mxu0 %v20
    %201 = vmatmul.mubr.f32.gmra.mrb[0].mxu0 %v19
    %v202 = vpop.f32.mrb[0].mxu0
    %v203 = vadd.f32 0.0, %v202
    %v204 = vpop.f32.mrb[0].mxu0
    %205 = vdwg.mxu0
    %206 = vmatprep.subr.mxu0 0.0
    %207 = vmatpush1.msra.mxu0 %v58
    %208 = vmatprep.subr.mxu0 0.0
    %209 = vmatpush1.msra.mxu0 %v59
    %210 = vmatprep.subr.mxu0 0.0
    %211 = vmatpush1.msra.mxu0 %v60
    %212 = vmatprep.subr.mxu0 0.0
    %213 = vmatpush1.msra.mxu0 %v61
    %214 = vmatprep.subr.mxu0 0.0
    %215 = vmatpush1.msra.mxu0 %v62
    %216 = vmatprep.subr.mxu0 0.0
    %217 = vmatpush1.msra.mxu0 %v63
    %218 = vmatprep.subr.mxu0 0.0
    %219 = vmatpush1.msra.mxu0 %v64
    %220 = vmatprep.subr.mxu0 0.0
    %221 = vmatpush1.msra.mxu0 %v65
    %222 = vmatprep.subr.mxu0 0.0
    %223 = vmatpush1.msra.mxu0 %v66
    %224 = vmatprep.subr.mxu0 0.0
    %225 = vmatpush1.msra.mxu0 %v67
    %226 = vmatprep.subr.mxu0 0.0
    %227 = vmatpush1.msra.mxu0 %v68
    %228 = vmatprep.subr.mxu0 0.0
    %229 = vmatpush1.msra.mxu0 %v69
    %230 = vmatprep.subr.mxu0 0.0
    %231 = vmatpush1.msra.mxu0 %v70
    %232 = vmatprep.subr.mxu0 0.0
    %233 = vmatpush1.msra.mxu0 %v71
    %234 = vmatprep.subr.mxu0 0.0
    %235 = vmatpush1.msra.mxu0 %v72
    %236 = vmatprep.subr.mxu0 0.0
    %237 = vmatpush1.msra.mxu0 %v73
    %238 = vmatprep.subr.mxu0 0.0
    %239 = vmatpush1.msra.mxu0 %v74
    %240 = vmatprep.subr.mxu0 0.0
    %241 = vmatpush1.msra.mxu0 %v75
    %242 = vmatprep.subr.mxu0 0.0
    %243 = vmatpush1.msra.mxu0 %v76
    %244 = vmatprep.subr.mxu0 0.0
    %245 = vmatpush1.msra.mxu0 %v77
    %246 = vmatprep.subr.mxu0 0.0
    %247 = vmatpush1.msra.mxu0 %v78
    %248 = vmatprep.subr.mxu0 0.0
    %249 = vmatpush1.msra.mxu0 %v79
    %250 = vmatprep.subr.mxu0 0.0
    %251 = vmatpush1.msra.mxu0 %v80
    %252 = vmatprep.subr.mxu0 0.0
    %253 = vmatpush1.msra.mxu0 %v81
    %254 = vmatprep.subr.mxu0 0.0
    %255 = vmatpush1.msra.mxu0 %v82
    %256 = vmatprep.subr.mxu0 0.0
    %257 = vmatpush1.msra.mxu0 %v83
    %258 = vmatprep.subr.mxu0 0.0
    %259 = vmatpush1.msra.mxu0 %v84
    %260 = vmatprep.subr.mxu0 0.0
    %261 = vmatpush1.msra.mxu0 %v85
    %262 = vmatprep.subr.mxu0 0.0
    %263 = vmatpush1.msra.mxu0 %v86
    %264 = vmatprep.subr.mxu0 0.0
    %265 = vmatpush1.msra.mxu0 %v87
    %266 = vmatprep.subr.mxu0 0.0
    %267 = vmatpush1.msra.mxu0 %v88
    %268 = vmatprep.subr.mxu0 0.0
    %269 = vmatpush1.msra.mxu0 %v89
    %270 = vmatprep.mubr.f32.mxu0 %v15
    %271 = vmatmul.mubr.f32.gmra.mrb[0].mxu0 %v14
    %v272 = vpop.f32.mrb[0].mxu0
    %v273 = vadd.f32 %v198, %v272
    %v274 = vpop.f32.mrb[0].mxu0
    %275 = vmatprep.mubr.f32.mxu0 %v22
    %276 = vmatmul.mubr.f32.gmra.mrb[0].mxu0 %v21
    %v277 = vpop.f32.mrb[0].mxu0
    %v278 = vadd.f32 %v203, %v277
    %v279 = vpop.f32.mrb[0].mxu0
    %280 = vdwg.mxu0
    %281 = vmatprep.subr.mxu0 0.0
    %282 = vmatpush1.msra.mxu0 %v90
    %283 = vmatprep.subr.mxu0 0.0
    %284 = vmatpush1.msra.mxu0 %v91
    %285 = vmatprep.subr.mxu0 0.0
    %286 = vmatpush1.msra.mxu0 %v92
    %287 = vmatprep.subr.mxu0 0.0
    %288 = vmatpush1.msra.mxu0 %v93
    %289 = vmatprep.subr.mxu0 0.0
    %290 = vmatpush1.msra.mxu0 %v94
    %291 = vmatprep.subr.mxu0 0.0
    %292 = vmatpush1.msra.mxu0 %v95
    %293 = vmatprep.subr.mxu0 0.0
    %294 = vmatpush1.msra.mxu0 %v96
    %295 = vmatprep.subr.mxu0 0.0
    %296 = vmatpush1.msra.mxu0 %v97
    %297 = vmatprep.subr.mxu0 0.0
    %298 = vmatpush1.msra.mxu0 %v98
    %299 = vmatprep.subr.mxu0 0.0
    %300 = vmatpush1.msra.mxu0 %v99
    %301 = vmatprep.subr.mxu0 0.0
    %302 = vmatpush1.msra.mxu0 %v100
    %303 = vmatprep.subr.mxu0 0.0
    %304 = vmatpush1.msra.mxu0 %v101
    %305 = vmatprep.subr.mxu0 0.0
    %306 = vmatpush1.msra.mxu0 %v102
    %307 = vmatprep.subr.mxu0 0.0
    %308 = vmatpush1.msra.mxu0 %v103
    %309 = vmatprep.subr.mxu0 0.0
    %310 = vmatpush1.msra.mxu0 %v104
    %311 = vmatprep.subr.mxu0 0.0
    %312 = vmatpush1.msra.mxu0 %v105
    %313 = vmatprep.subr.mxu0 0.0
    %314 = vmatpush1.msra.mxu0 %v106
    %315 = vmatprep.subr.mxu0 0.0
    %316 = vmatpush1.msra.mxu0 %v107
    %317 = vmatprep.subr.mxu0 0.0
    %318 = vmatpush1.msra.mxu0 %v108
    %319 = vmatprep.subr.mxu0 0.0
    %320 = vmatpush1.msra.mxu0 %v109
    %321 = vmatprep.subr.mxu0 0.0
    %322 = vmatpush1.msra.mxu0 %v110
    %323 = vmatprep.subr.mxu0 0.0
    %324 = vmatpush1.msra.mxu0 %v111
    %325 = vmatprep.subr.mxu0 0.0
    %326 = vmatpush1.msra.mxu0 %v112
    %327 = vmatprep.subr.mxu0 0.0
    %328 = vmatpush1.msra.mxu0 %v113
    %329 = vmatprep.subr.mxu0 0.0
    %330 = vmatpush1.msra.mxu0 %v114
    %331 = vmatprep.subr.mxu0 0.0
    %332 = vmatpush1.msra.mxu0 %v115
    %333 = vmatprep.subr.mxu0 0.0
    %334 = vmatpush1.msra.mxu0 %v116
    %335 = vmatprep.subr.mxu0 0.0
    %336 = vmatpush1.msra.mxu0 %v117
    %337 = vmatprep.subr.mxu0 0.0
    %338 = vmatpush1.msra.mxu0 %v118
    %339 = vmatprep.subr.mxu0 0.0
    %340 = vmatpush1.msra.mxu0 %v119
    %341 = vmatprep.subr.mxu0 0.0
    %342 = vmatpush1.msra.mxu0 %v120
    %343 = vmatprep.subr.mxu0 0.0
    %344 = vmatpush1.msra.mxu0 %v121
    %345 = vmatprep.mubr.f32.mxu0 %v17
    %346 = vmatmul.mubr.f32.gmra.mrb[0].mxu0 %v16
    %v347 = vpop.f32.mrb[0].mxu0
    %v348 = vadd.f32 %v273, %v347
    %v349 = vpop.f32.mrb[0].mxu0
    %350 = vmatprep.mubr.f32.mxu0 %v24
    %351 = vmatmul.mubr.f32.gmra.mrb[0].mxu0 %v23
    %v352 = vpop.f32.mrb[0].mxu0
    %v353 = vadd.f32 %v278, %v352
    %v354 = vpop.f32.mrb[0].mxu0
    %355 = vdwg.mxu0
    %356 = vmatprep.subr.mxu0 0.0
    %357 = vmatpush1.msra.mxu0 %v122
    %358 = vmatprep.subr.mxu0 0.0
    %359 = vmatpush1.msra.mxu0 %v123
    %360 = vmatprep.subr.mxu0 0.0
    %361 = vmatpush1.msra.mxu0 0.0
    %362 = vmatprep.subr.mxu0 0.0
    %363 = vmatpush1.msra.mxu0 0.0
    %364 = vmatprep.subr.mxu0 0.0
    %365 = vmatpush1.msra.mxu0 0.0
    %366 = vmatprep.subr.mxu0 0.0
    %367 = vmatpush1.msra.mxu0 0.0
    %368 = vmatprep.subr.mxu0 0.0
    %369 = vmatpush1.msra.mxu0 0.0
    %370 = vmatprep.subr.mxu0 0.0
    %371 = vmatpush1.msra.mxu0 0.0
    %372 = vmatprep.subr.mxu0 0.0
    %373 = vmatpush1.msra.mxu0 0.0
    %374 = vmatprep.subr.mxu0 0.0
    %375 = vmatpush1.msra.mxu0 0.0
    %376 = vmatprep.subr.mxu0 0.0
    %377 = vmatpush1.msra.mxu0 0.0
    %378 = vmatprep.subr.mxu0 0.0
    %379 = vmatpush1.msra.mxu0 0.0
    %380 = vmatprep.subr.mxu0 0.0
    %381 = vmatpush1.msra.mxu0 0.0
    %382 = vmatprep.subr.mxu0 0.0
    %383 = vmatpush1.msra.mxu0 0.0
    %384 = vmatprep.subr.mxu0 0.0
    %385 = vmatpush1.msra.mxu0 0.0
    %386 = vmatprep.subr.mxu0 0.0
    %387 = vmatpush1.msra.mxu0 0.0
    %388 = vmatprep.subr.mxu0 0.0
    %389 = vmatpush1.msra.mxu0 0.0
    %390 = vmatprep.subr.mxu0 0.0
    %391 = vmatpush1.msra.mxu0 0.0
    %392 = vmatprep.subr.mxu0 0.0
    %393 = vmatpush1.msra.mxu0 0.0
    %394 = vmatprep.subr.mxu0 0.0
    %395 = vmatpush1.msra.mxu0 0.0
    %396 = vmatprep.subr.mxu0 0.0
    %397 = vmatpush1.msra.mxu0 0.0
    %398 = vmatprep.subr.mxu0 0.0
    %399 = vmatpush1.msra.mxu0 0.0
    %400 = vmatprep.subr.mxu0 0.0
    %401 = vmatpush1.msra.mxu0 0.0
    %402 = vmatprep.subr.mxu0 0.0
    %403 = vmatpush1.msra.mxu0 0.0
    %404 = vmatprep.subr.mxu0 0.0
    %405 = vmatpush1.msra.mxu0 0.0
    %406 = vmatprep.subr.mxu0 0.0
    %407 = vmatpush1.msra.mxu0 0.0
    %408 = vmatprep.subr.mxu0 0.0
    %409 = vmatpush1.msra.mxu0 0.0
    %410 = vmatprep.subr.mxu0 0.0
    %411 = vmatpush1.msra.mxu0 0.0
    %412 = vmatprep.subr.mxu0 0.0
    %413 = vmatpush1.msra.mxu0 0.0
    %414 = vmatprep.subr.mxu0 0.0
    %415 = vmatpush1.msra.mxu0 0.0
    %416 = vmatprep.subr.mxu0 0.0
    %417 = vmatpush1.msra.mxu0 0.0
    %418 = vmatprep.subr.mxu0 0.0
    %419 = vmatpush1.msra.mxu0 0.0
    %420 = vmatprep.mubr.f32.mxu0 0.0
    %421 = vmatmul.mubr.f32.gmra.mrb[0].mxu0 %v126
    %v422 = vpop.f32.mrb[0].mxu0
    %v423 = vadd.f32 %v348, %v422
    %v424 = vpop.f32.mrb[0].mxu0
    %425 = vmatprep.mubr.f32.mxu0 0.0
    %426 = vmatmul.mubr.f32.gmra.mrb[0].mxu0 %v129
    %v427 = vpop.f32.mrb[0].mxu0
    %v428 = vadd.f32 %v353, %v427
    %v429 = vpop.f32.mrb[0].mxu0
    %430 = vdwg.mxu0
    %vm431 = vcmask 80896
    %432 = vst.msk [vmem:[#allocation2] sm:$0xff] %vm431, %v423
    %433 = vst.msk [vmem:[#allocation2 + $0x8] sm:$0xff] %vm431, %v428
    // Predicated region
    $region10: #{mlp_forward.1} parent=1 // pred_check
      _
    $region11: #{mlp_forward.1} parent=1 // pred_check_branch
      %435 = sbr.rel (0) target = $region13
    $region12: #{mlp_forward.1} parent=1 // pred_region
      %s437 = ssub.s32 256, 256
      %438 = vsyncadd [#allocation3], %s437
      %s439 = sshll.u32 [#allocation2], 4
      %s440 = int_to_ptr.vmem [resolvable:$true] %s439
      %445 = dma.vmem_to_hbm [thread:$0]  %s440, 256, %s2, [#allocation3], 128, 128, 8
    $region13: #{mlp_forward.1} parent=1 // pred_fallthru
      _
    // Predicated region
    $region14: #{mlp_forward.1} parent=1 // pred_check
      _
    $region15: #{mlp_forward.1} parent=1 // pred_check_branch
      %447 = sbr.rel (0) target = $region17
    $region16: #{mlp_forward.1} parent=1 // pred_region
      %448 = dma.done [#allocation3], 256
    $region17: #{mlp_forward.1} parent=1 // pred_fallthru
      _
    %449 = vsyncpa [#allocation3], 1

</llo_original>
